<compile_context>
chip_gen: v6e
topology: v6e:2x2x1
jax: 0.10.0
libtpu: 0.0.40
codegen_flags: <defaults>
</compile_context>

<pallas_src>
import jax
import jax.numpy as jnp
from jax.experimental import pallas as pl
from jax.experimental.pallas import tpu as pltpu


def at_layer_kernel(x_ref, w1_ref, b1_ref, w2_ref, b2_ref, o_ref):
    # x_ref : (BB, C, HW)   native dtype
    # w1_ref: (HW, HIDP)    f32, fc1[0] weight, input-major, zero-padded
    # b1_ref: (1, HIDP)     f32
    # w2_ref: (HIDP, HW)    f32, fc1[2] weight, input-major, zero-padded
    # b2_ref: (1, HW)       f32
    # o_ref : (BB, C, HW)   native dtype
    BB, C, HW = x_ref.shape
    inv_c = 1.0 / float(C)

    # ---- channel mean, f32 accumulation, chunked over C (bounded live vregs) ----
    CK = 8 if C > 8 else C
    n_full = C // CK
    rem = C - n_full * CK

    acc = jnp.zeros((BB, HW), jnp.float32)
    if n_full > 1:
        def sum_body(i, a):
            c0 = pl.multiple_of(i * CK, CK)
            return a + jnp.sum(x_ref[:, pl.ds(c0, CK), :], axis=1,
                               dtype=jnp.float32)
        acc = jax.lax.fori_loop(0, n_full, sum_body, acc)
    elif n_full == 1:
        acc = acc + jnp.sum(x_ref[:, 0:CK, :], axis=1, dtype=jnp.float32)
    if rem > 0:
        acc = acc + jnp.sum(x_ref[:, n_full * CK:, :], axis=1, dtype=jnp.float32)
    y = acc * inv_c                                            # (BB, HW) f32

    # ---- tiny MLP on the MXU (f32 accumulation) ----
    h1 = jnp.dot(y, w1_ref[...], preferred_element_type=jnp.float32) + b1_ref[...]
    h1 = jnp.maximum(h1, 0.0)                                  # ReLU
    h2 = jnp.dot(h1, w2_ref[...], preferred_element_type=jnp.float32) + b2_ref[...]

    # h_tanh: relu6(x + 3) / 6 - 0.5
    a = jnp.clip(h2 + 3.0, 0.0, 6.0) * (1.0 / 6.0) - 0.5       # (BB, HW) f32

    # out = x * (1 + a), attention map broadcast over the channel axis.
    scale = (1.0 + a).astype(o_ref.dtype)[:, None, :]          # (BB, 1, HW)

    # ---- elementwise scale + store, chunked over C (read x at point of use) ----
    if n_full > 1:
        def mul_body(i, carry):
            c0 = pl.multiple_of(i * CK, CK)
            o_ref[:, pl.ds(c0, CK), :] = x_ref[:, pl.ds(c0, CK), :] * scale
            return carry
        jax.lax.fori_loop(0, n_full, mul_body, 0)
    elif n_full == 1:
        o_ref[:, 0:CK, :] = x_ref[:, 0:CK, :] * scale
    if rem > 0:
        o_ref[:, n_full * CK:, :] = x_ref[:, n_full * CK:, :] * scale


def _round_up(n, m):
    return ((n + m - 1) // m) * m


def _vmem_capacity_bytes():
    """Per-core VMEM capacity; conservative 64 MiB (v7x per-TC) fallback."""
    try:
        cap = int(pltpu.get_tpu_info().vmem_capacity_bytes)
        if cap > 0:
            return cap
    except Exception:
        pass
    return 64 * 1024 * 1024


def _needs_even_grid():
    """True on chips with 2 TensorCores per chip (v7x): keep the grid even."""
    try:
        kind = jax.devices()[0].device_kind.lower()
        return "v7" in kind
    except Exception:
        return False


def _choose_block_batch(B, C, HW, HIDP, itemsize, vmem_limit_bytes, even_grid):
    """Pick batch block size BB and grid length, against the REAL footprint:

      x block  : BB*C*HW*itemsize, double-buffered   -> 2x
      out block: BB*C*HW*itemsize, double-buffered   -> 2x
      weights  : (2*HW*HIDP + HIDP + HW)*4, assume double-buffered -> 2x
      f32 temps: ~BB*(3*HW + HIDP)*4   (y, h1, h2, scale)
    """
    weight_bytes = 2 * 4 * (2 * HW * HIDP + HIDP + HW)
    per_batch = 4 * C * HW * itemsize + 4 * (3 * HW + HIDP)
    budget = int(vmem_limit_bytes * 0.8) - weight_bytes
    bb = max(1, budget // per_batch)
    bb = min(bb, B, 1024)   # per-step overhead is fully amortized well before 1024
    # TODO(synk): if a single batch element's (C, HW) slab still exceeds the budget,
    # fall back to a two-kernel form (C-tiled reduction -> (B, HW) map, then a
    # C-tiled elementwise scale kernel) instead of an oversized single block.

    grid_steps = pl.cdiv(B, bb)
    if even_grid and B > 1 and grid_steps % 2 == 1:
        # Two TensorCores share the "parallel" grid axis: keep step count even.
        grid_steps += 1
        bb = pl.cdiv(B, grid_steps)
        grid_steps = pl.cdiv(B, bb)
        if grid_steps % 2 == 1:
            grid_steps += 1     # accept one fully-padded step; grid stays balanced
    return bb, grid_steps


def at_layer(x, w1, b1, w2, b2):
    """ATLayer forward.

    x : (B, C, H, W)
    w1: (HID, H*W)  -- fc1[0].weight, PyTorch nn.Linear layout (out, in)
    b1: (HID,)      -- fc1[0].bias
    w2: (H*W, HID)  -- fc1[2].weight, PyTorch layout (out, in)
    b2: (H*W,)      -- fc1[2].bias
    """
    B, C, H, W = x.shape
    HW = H * W
    HID = b1.shape[0]

    # Flatten spatial dims into the lane axis (lane-dense loads/stores).
    x_flat = x.reshape(B, C, HW)

    # Input-major weights for in-kernel y @ W; HID zero-padded to a multiple of
    # 128 so the intermediate fills full lanes (numerically a no-op).
    HIDP = _round_up(max(HID, 128), 128)
    pad_h = HIDP - HID
    w1_im = jnp.pad(jnp.transpose(w1).astype(jnp.float32), ((0, 0), (0, pad_h)))
    b1_p = jnp.pad(b1.astype(jnp.float32), (0, pad_h)).reshape(1, HIDP)
    w2_im = jnp.pad(jnp.transpose(w2).astype(jnp.float32), ((0, pad_h), (0, 0)))
    b2_2d = b2.astype(jnp.float32).reshape(1, HW)

    vmem_cap = _vmem_capacity_bytes()
    vmem_limit = int(vmem_cap * 0.75)      # explicit scoped limit with headroom
    BB, grid_steps = _choose_block_batch(
        B, C, HW, HIDP, x.dtype.itemsize, vmem_limit, _needs_even_grid())

    # Pad the batch so BB need not divide B (padded rows compute to finite
    # values from zero input and are sliced off below).
    B_pad = BB * grid_steps
    if B_pad != B:
        x_flat = jnp.pad(x_flat, ((0, B_pad - B), (0, 0), (0, 0)))

    out_flat = pl.pallas_call(
        at_layer_kernel,
        out_shape=jax.ShapeDtypeStruct((B_pad, C, HW), x.dtype),
        grid_spec=pltpu.PrefetchScalarGridSpec(
            num_scalar_prefetch=0,
            grid=(grid_steps,),
            in_specs=[
                pl.BlockSpec((BB, C, HW), lambda b: (b, 0, 0)),
                # Weights / biases: full-array blocks with constant index maps
                # so they stay resident in VMEM across grid steps.
                pl.BlockSpec((HW, HIDP), lambda b: (0, 0)),
                pl.BlockSpec((1, HIDP), lambda b: (0, 0)),
                pl.BlockSpec((HIDP, HW), lambda b: (0, 0)),
                pl.BlockSpec((1, HW), lambda b: (0, 0)),
            ],
            out_specs=pl.BlockSpec((BB, C, HW), lambda b: (b, 0, 0)),
        ),
        compiler_params=pltpu.CompilerParams(
            dimension_semantics=("parallel",),
            vmem_limit_bytes=vmem_limit,
        ),
    )(x_flat, w1_im, b1_p, w2_im, b2_2d)

    if B_pad != B:
        out_flat = out_flat[:B]
    return out_flat.reshape(B, C, H, W)


def reference(x, w1, b1, w2, b2):
    B, C, H, W = x.shape
    y = jnp.mean(x, axis=1).reshape(B, H * W)
    h1 = jnp.maximum(y @ w1.T + b1, 0.0)
    h2 = h1 @ w2.T + b2
    a = jnp.clip(h2 + 3.0, 0.0, 6.0) / 6.0 - 0.5
    return x * (1.0 + a.reshape(B, 1, H, W))


if __name__ == "__main__":
    # Small shapes consistent with the module: ATLayer(resolution=16, reduction=4)
    B, C, H, W = 2, 4, 16, 16
    resolution = H                          # module assumes square spatial dims
    HID = (resolution * resolution) // 4    # 64

    key = jax.random.PRNGKey(0)
    kx, k1, k2, k3, k4 = jax.random.split(key, 5)

    x = jax.random.normal(kx, (B, C, H, W), dtype=jnp.float32)

    # Deterministic synthetic parameters in PyTorch nn.Linear layout (out, in).
    scale1 = 1.0 / jnp.sqrt(float(H * W))
    scale2 = 1.0 / jnp.sqrt(float(HID))
    w1 = jax.random.normal(k1, (HID, H * W), dtype=jnp.float32) * scale1
    b1 = jax.random.normal(k2, (HID,), dtype=jnp.float32) * scale1
    w2 = jax.random.normal(k3, (H * W, HID), dtype=jnp.float32) * scale2
    b2 = jax.random.normal(k4, (H * W,), dtype=jnp.float32) * scale2

    out = at_layer(x, w1, b1, w2, b2)
    out = jax.block_until_ready(out)

    ref = reference(x, w1, b1, w2, b2)
    assert out.shape == (B, C, H, W)
    assert jnp.allclose(out, ref, atol=1e-5, rtol=1e-5), "mismatch vs reference"

    print("KERNEL_OK")
</pallas_src>

<mosaic_0001>
module attributes {stable_mosaic.version = 11 : i64} {
  func.func @at_layer_kernel(%arg0: i32, %arg1: memref<2x4x256xf32, #tpu.memory_space<vmem>>, %arg2: memref<256x128xf32, #tpu.memory_space<vmem>>, %arg3: memref<1x128xf32, #tpu.memory_space<vmem>>, %arg4: memref<128x256xf32, #tpu.memory_space<vmem>>, %arg5: memref<1x256xf32, #tpu.memory_space<vmem>>, %arg6: memref<2x4x256xf32, #tpu.memory_space<vmem>>) attributes {dimension_semantics = [#tpu.dimension_semantics<parallel>], iteration_bounds = array<i64: 1>, scalar_prefetch = 0 : i64, scratch_operands = 0 : i64, tpu.core_type = #tpu.core_type<tc>, window_params = [{transform_indices = @transform_0, window_bounds = array<i64: 2, 4, 256>}, {pipeline_mode = #tpu.pipeline_mode<synchronous>, transform_indices = @transform_1, window_bounds = array<i64: 256, 128>}, {pipeline_mode = #tpu.pipeline_mode<synchronous>, transform_indices = @transform_2, window_bounds = array<i64: 1, 128>}, {pipeline_mode = #tpu.pipeline_mode<synchronous>, transform_indices = @transform_3, window_bounds = array<i64: 128, 256>}, {pipeline_mode = #tpu.pipeline_mode<synchronous>, transform_indices = @transform_4, window_bounds = array<i64: 1, 256>}, {transform_indices = @transform_5, window_bounds = array<i64: 2, 4, 256>}]} {
    %cst = arith.constant 0.000000e+00 : f32
    %0 = vector.broadcast %cst : f32 to vector<2x256xf32>
    %c0 = arith.constant 0 : index
    %c0_0 = arith.constant 0 : index
    %c0_1 = arith.constant 0 : index
    %1 = vector.load %arg1[%c0, %c0_0, %c0_1] : memref<2x4x256xf32, #tpu.memory_space<vmem>>, vector<2x4x256xf32>
    %cst_2 = arith.constant dense<0.000000e+00> : vector<2x256xf32>
    %2 = vector.multi_reduction <add>, %1, %cst_2 [1] : vector<2x4x256xf32> to vector<2x256xf32>
    %3 = arith.addf %0, %2 : vector<2x256xf32>
    %cst_3 = arith.constant 2.500000e-01 : f32
    %4 = vector.broadcast %cst_3 : f32 to vector<2x256xf32>
    %5 = arith.mulf %3, %4 : vector<2x256xf32>
    %c0_4 = arith.constant 0 : index
    %c0_5 = arith.constant 0 : index
    %6 = vector.load %arg2[%c0_4, %c0_5] : memref<256x128xf32, #tpu.memory_space<vmem>>, vector<256x128xf32>
    %cst_6 = arith.constant dense<0.000000e+00> : vector<2x128xf32>
    %7 = tpu.matmul %5, %6, %cst_6 {dimension_numbers = #tpu.dot_dimension_numbers<[1], [0], [0], [1], [0, 0, 1, 1], [], []>} : vector<2x256xf32>, vector<256x128xf32>, vector<2x128xf32> -> vector<2x128xf32>
    %c0_7 = arith.constant 0 : index
    %c0_8 = arith.constant 0 : index
    %8 = vector.load %arg3[%c0_7, %c0_8] : memref<1x128xf32, #tpu.memory_space<vmem>>, vector<1x128xf32>
    %9 = vector.broadcast %8 : vector<1x128xf32> to vector<2x128xf32>
    %10 = arith.addf %7, %9 : vector<2x128xf32>
    %cst_9 = arith.constant 0.000000e+00 : f32
    %11 = vector.broadcast %cst_9 : f32 to vector<2x128xf32>
    %12 = arith.maximumf %10, %11 : vector<2x128xf32>
    %c0_10 = arith.constant 0 : index
    %c0_11 = arith.constant 0 : index
    %13 = vector.load %arg4[%c0_10, %c0_11] : memref<128x256xf32, #tpu.memory_space<vmem>>, vector<128x256xf32>
    %cst_12 = arith.constant dense<0.000000e+00> : vector<2x256xf32>
    %14 = tpu.matmul %12, %13, %cst_12 {dimension_numbers = #tpu.dot_dimension_numbers<[1], [0], [0], [1], [0, 0, 1, 1], [], []>} : vector<2x128xf32>, vector<128x256xf32>, vector<2x256xf32> -> vector<2x256xf32>
    %c0_13 = arith.constant 0 : index
    %c0_14 = arith.constant 0 : index
    %15 = vector.load %arg5[%c0_13, %c0_14] : memref<1x256xf32, #tpu.memory_space<vmem>>, vector<1x256xf32>
    %16 = vector.broadcast %15 : vector<1x256xf32> to vector<2x256xf32>
    %17 = arith.addf %14, %16 : vector<2x256xf32>
    %cst_15 = arith.constant 3.000000e+00 : f32
    %18 = vector.broadcast %cst_15 : f32 to vector<2x256xf32>
    %19 = arith.addf %17, %18 : vector<2x256xf32>
    %cst_16 = arith.constant 0.000000e+00 : f32
    %cst_17 = arith.constant 6.000000e+00 : f32
    %20 = vector.broadcast %cst_16 : f32 to vector<2x256xf32>
    %21 = arith.maximumf %20, %19 : vector<2x256xf32>
    %22 = vector.broadcast %cst_17 : f32 to vector<2x256xf32>
    %23 = arith.minimumf %22, %21 : vector<2x256xf32>
    %cst_18 = arith.constant 0.166666672 : f32
    %24 = vector.broadcast %cst_18 : f32 to vector<2x256xf32>
    %25 = arith.mulf %23, %24 : vector<2x256xf32>
    %cst_19 = arith.constant 5.000000e-01 : f32
    %26 = vector.broadcast %cst_19 : f32 to vector<2x256xf32>
    %27 = arith.subf %25, %26 : vector<2x256xf32>
    %cst_20 = arith.constant 1.000000e+00 : f32
    %28 = vector.broadcast %cst_20 : f32 to vector<2x256xf32>
    %29 = arith.addf %28, %27 : vector<2x256xf32>
    %30 = vector.shape_cast %29 : vector<2x256xf32> to vector<2x1x256xf32>
    %c0_21 = arith.constant 0 : index
    %c0_22 = arith.constant 0 : index
    %c0_23 = arith.constant 0 : index
    %31 = vector.load %arg1[%c0_21, %c0_22, %c0_23] : memref<2x4x256xf32, #tpu.memory_space<vmem>>, vector<2x4x256xf32>
    %32 = vector.broadcast %30 : vector<2x1x256xf32> to vector<2x4x256xf32>
    %33 = arith.mulf %31, %32 : vector<2x4x256xf32>
    %c0_24 = arith.constant 0 : index
    %c0_25 = arith.constant 0 : index
    %c0_26 = arith.constant 0 : index
    %34 = vector.load %arg6[%c0_24, %c0_25, %c0_26] : memref<2x4x256xf32, #tpu.memory_space<vmem>>, vector<2x4x256xf32>
    tpu.vector_store %arg6[%c0_24, %c0_25, %c0_26], %33 {strides = array<i32>} : memref<2x4x256xf32, #tpu.memory_space<vmem>>, vector<2x4x256xf32>,
    return
  }
  func.func @transform_0(%arg0: i32) -> (i32, i32, i32) {
    %c0_i32 = arith.constant 0 : i32
    %c0_i32_0 = arith.constant 0 : i32
    %c0_i32_1 = arith.constant 0 : i32
    return %arg0, %c0_i32, %c0_i32_0 : i32, i32, i32
  }
  func.func @transform_1(%arg0: i32) -> (i32, i32) {
    %c0_i32 = arith.constant 0 : i32
    %c0_i32_0 = arith.constant 0 : i32
    %c0_i32_1 = arith.constant 0 : i32
    return %c0_i32, %c0_i32_0 : i32, i32
  }
  func.func @transform_2(%arg0: i32) -> (i32, i32) {
    %c0_i32 = arith.constant 0 : i32
    %c0_i32_0 = arith.constant 0 : i32
    %c0_i32_1 = arith.constant 0 : i32
    return %c0_i32, %c0_i32_0 : i32, i32
  }
  func.func @transform_3(%arg0: i32) -> (i32, i32) {
    %c0_i32 = arith.constant 0 : i32
    %c0_i32_0 = arith.constant 0 : i32
    %c0_i32_1 = arith.constant 0 : i32
    return %c0_i32, %c0_i32_0 : i32, i32
  }
  func.func @transform_4(%arg0: i32) -> (i32, i32) {
    %c0_i32 = arith.constant 0 : i32
    %c0_i32_0 = arith.constant 0 : i32
    %c0_i32_1 = arith.constant 0 : i32
    return %c0_i32, %c0_i32_0 : i32, i32
  }
  func.func @transform_5(%arg0: i32) -> (i32, i32, i32) {
    %c0_i32 = arith.constant 0 : i32
    %c0_i32_0 = arith.constant 0 : i32
    %c0_i32_1 = arith.constant 0 : i32
    return %arg0, %c0_i32, %c0_i32_0 : i32, i32, i32
  }
}

</mosaic_0001>

<llo_original>
// kernel: tpu_custom_call.1
$region0: #{tpu_custom_call.1}
  #allocation0 [shape = 'u32[]', space=smem, size = 0x4, offset = 0x4, fixed_abs, tag = 'smem constant byte address 0x4 - core index']
  #allocation1 [shape = 'u32[144,128]{1,0:T(1,128)}', space=vmem, size = 0x12000, scoped, tag = 'internal scratch']
  %s0 = inlined_call_operand.hbm [shape: f32[2,4,256], index: 0, kind: input, shape index: {}]
  %s1 = inlined_call_operand.hbm [shape: f32[256,128], index: 1, kind: input, shape index: {}]
  %s2 = inlined_call_operand.vmem [shape: f32[1,128], index: 2, kind: input, shape index: {}]
  %s3 = inlined_call_operand.hbm [shape: f32[128,256], index: 3, kind: input, shape index: {}]
  %s4 = inlined_call_operand.vmem [shape: f32[1,256], index: 4, kind: input, shape index: {}]
  %s5 = inlined_call_operand.hbm [shape: f32[2,4,256], index: 5, kind: output, shape index: {}]
  %s6 = sld [smem:[#allocation0]]
  $region42: #{tpu_custom_call.1} parent=0
    _
  %s8 = ssub.s32 1, %s6
  %s9 = scalar_select 0, %s8, %s6
  $region1: #{tpu_custom_call.1} parent=0
    #allocation2 [shape = 'u8[8192]{0}', space=vmem, size = 0x2000, scoped, tag = 'input window, operand 0, single buffered']
    #allocation3 [shape = 's32[1]{0}', space=sflag, size = 0x4, scoped, tag = 'scoped memory for tpu_custom_call.1']
    #allocation4 [shape = 's32[1]{0}', space=sflag, size = 0x4, scoped, tag = 'scoped memory for tpu_custom_call.1']
    #allocation5 [shape = 'u8[131072]{0}', space=vmem, size = 0x20000, scoped, tag = 'input window, operand 1, single buffered']
    #allocation6 [shape = 's32[1]{0}', space=sflag, size = 0x4, scoped, tag = 'scoped memory for tpu_custom_call.1']
    #allocation7 [shape = 'u8[131072]{0}', space=vmem, size = 0x20000, scoped, tag = 'input window, operand 3, single buffered']
    #allocation8 [shape = 'u8[8192]{0}', space=vmem, size = 0x2000, scoped, tag = 'output window, operand 0, single buffered']
    %10 = vsyncpa [#allocation3], 0
    %11 = vsyncpa [#allocation6], 0
    %12 = vsyncpa [#allocation4], 0
    // Predicated region
    $region2: #{tpu_custom_call.1} parent=1 // pred_check
      _
    $region3: #{tpu_custom_call.1} parent=1 // pred_check_branch
      %14 = sbr.rel (0) target = $region5
    $region4: #{tpu_custom_call.1} parent=1 // pred_region
      %s16 = ssub.s32 256, 256
      %17 = vsyncadd [#allocation3], %s16
      %s18 = sshll.u32 [#allocation2], 4
      %s19 = int_to_ptr.vmem [resolvable:$true] %s18
      %24 = dma.hbm_to_vmem [thread:$0]  %s0, 256, %s19, [#allocation3], 128, 128, 8
    $region5: #{tpu_custom_call.1} parent=1 // pred_fallthru
      _
    // Predicated region
    $region6: #{tpu_custom_call.1} parent=1 // pred_check
      _
    $region7: #{tpu_custom_call.1} parent=1 // pred_check_branch
      %26 = sbr.rel (0) target = $region9
    $region8: #{tpu_custom_call.1} parent=1 // pred_region
      %s28 = ssub.s32 4096, 4096
      %29 = vsyncadd [#allocation6], %s28
      %s30 = sshll.u32 [#allocation5], 4
      %s31 = int_to_ptr.vmem [resolvable:$true] %s30
      %36 = dma.hbm_to_vmem [thread:$0]  %s1, 4096, %s31, [#allocation6], 128, 128, 8
    $region9: #{tpu_custom_call.1} parent=1 // pred_fallthru
      _
    // Predicated region
    $region10: #{tpu_custom_call.1} parent=1 // pred_check
      _
    $region11: #{tpu_custom_call.1} parent=1 // pred_check_branch
      %38 = sbr.rel (0) target = $region13
    $region12: #{tpu_custom_call.1} parent=1 // pred_region
      _
    $region13: #{tpu_custom_call.1} parent=1 // pred_fallthru
      _
    // Predicated region
    $region14: #{tpu_custom_call.1} parent=1 // pred_check
      _
    $region15: #{tpu_custom_call.1} parent=1 // pred_check_branch
      %40 = sbr.rel (0) target = $region17
    $region16: #{tpu_custom_call.1} parent=1 // pred_region
      %s42 = ssub.s32 4096, 4096
      %43 = vsyncadd [#allocation6], %s42
      %s44 = sshll.u32 [#allocation7], 4
      %s45 = int_to_ptr.vmem [resolvable:$true] %s44
      %50 = dma.hbm_to_vmem [thread:$0]  %s3, 4096, %s45, [#allocation6], 256, 256, 16
    $region17: #{tpu_custom_call.1} parent=1 // pred_fallthru
      _
    // Predicated region
    $region18: #{tpu_custom_call.1} parent=1 // pred_check
      _
    $region19: #{tpu_custom_call.1} parent=1 // pred_check_branch
      %52 = sbr.rel (0) target = $region21
    $region20: #{tpu_custom_call.1} parent=1 // pred_region
      _
    $region21: #{tpu_custom_call.1} parent=1 // pred_fallthru
      _
    // Predicated region
    $region22: #{tpu_custom_call.1} parent=1 // pred_check
      _
    $region23: #{tpu_custom_call.1} parent=1 // pred_check_branch
      %54 = sbr.rel (0) target = $region25
    $region24: #{tpu_custom_call.1} parent=1 // pred_region
      %55 = dma.done [#allocation3], 256
    $region25: #{tpu_custom_call.1} parent=1 // pred_fallthru
      _
    // Predicated region
    $region26: #{tpu_custom_call.1} parent=1 // pred_check
      _
    $region27: #{tpu_custom_call.1} parent=1 // pred_check_branch
      %57 = sbr.rel (0) target = $region29
    $region28: #{tpu_custom_call.1} parent=1 // pred_region
      %58 = dma.done [#allocation6], 4096
    $region29: #{tpu_custom_call.1} parent=1 // pred_fallthru
      _
    // Predicated region
    $region30: #{tpu_custom_call.1} parent=1 // pred_check
      _
    $region31: #{tpu_custom_call.1} parent=1 // pred_check_branch
      %60 = sbr.rel (0) target = $region33
    $region32: #{tpu_custom_call.1} parent=1 // pred_region
      %61 = dma.done [#allocation6], 4096
    $region33: #{tpu_custom_call.1} parent=1 // pred_fallthru
      _
    %v62 = vld [vmem:[#allocation2] sm:$0xff]
    %v63 = vld [vmem:[#allocation2 + $0x8] sm:$0xff]
    %v66 = vcombine.high %v62, %v62
    %v67 = vcombine.high %v63, %v63
    %vm70 = vcmask 1043456
    %v71 = vsel %vm70, %v62, 0.0
    %v72 = vrot.slane %v71, 4
    %v73 = vadd.f32 %v71, %v72
    %v74 = vrot.slane %v73, 2
    %v75 = vadd.f32 %v73, %v74
    %v76 = vrot.slane %v75, 1
    %v77 = vadd.f32 %v75, %v76
    %v78 = vsel %vm70, %v66, 0.0
    %v79 = vrot.slane %v78, 4
    %v80 = vadd.f32 %v78, %v79
    %v81 = vrot.slane %v80, 2
    %v82 = vadd.f32 %v80, %v81
    %v83 = vrot.slane %v82, 1
    %v84 = vadd.f32 %v82, %v83
    %v85 = vsel %vm70, %v63, 0.0
    %v86 = vrot.slane %v85, 4
    %v87 = vadd.f32 %v85, %v86
    %v88 = vrot.slane %v87, 2
    %v89 = vadd.f32 %v87, %v88
    %v90 = vrot.slane %v89, 1
    %v91 = vadd.f32 %v89, %v90
    %v92 = vsel %vm70, %v67, 0.0
    %v93 = vrot.slane %v92, 4
    %v94 = vadd.f32 %v92, %v93
    %v95 = vrot.slane %v94, 2
    %v96 = vadd.f32 %v94, %v95
    %v97 = vrot.slane %v96, 1
    %v98 = vadd.f32 %v96, %v97
    %v99 = vadd.f32 %v77, 0.0
    %v100 = vadd.f32 %v84, 0.0
    %v101 = vadd.f32 %v91, 0.0
    %v102 = vadd.f32 %v98, 0.0
    %v103 = vmul.f32 %v99, 0.25
    %v104 = vmul.f32 %v100, 0.25
    %v105 = vmul.f32 %v101, 0.25
    %v106 = vmul.f32 %v102, 0.25
    %v107 = vld [vmem:[#allocation5] sm:$0xff]
    %v108 = vld [vmem:[#allocation5 + $0x8] sm:$0xff]
    %v109 = vld [vmem:[#allocation5 + $0x10] sm:$0xff]
    %v110 = vld [vmem:[#allocation5 + $0x18] sm:$0xff]
    %v111 = vld [vmem:[#allocation5 + $0x20] sm:$0xff]
    %v112 = vld [vmem:[#allocation5 + $0x28] sm:$0xff]
    %v113 = vld [vmem:[#allocation5 + $0x30] sm:$0xff]
    %v114 = vld [vmem:[#allocation5 + $0x38] sm:$0xff]
    %v115 = vld [vmem:[#allocation5 + $0x40] sm:$0xff]
    %v116 = vld [vmem:[#allocation5 + $0x48] sm:$0xff]
    %v117 = vld [vmem:[#allocation5 + $0x50] sm:$0xff]
    %v118 = vld [vmem:[#allocation5 + $0x58] sm:$0xff]
    %v119 = vld [vmem:[#allocation5 + $0x60] sm:$0xff]
    %v120 = vld [vmem:[#allocation5 + $0x68] sm:$0xff]
    %v121 = vld [vmem:[#allocation5 + $0x70] sm:$0xff]
    %v122 = vld [vmem:[#allocation5 + $0x78] sm:$0xff]
    %v123 = vld [vmem:[#allocation5 + $0x80] sm:$0xff]
    %v124 = vld [vmem:[#allocation5 + $0x88] sm:$0xff]
    %v125 = vld [vmem:[#allocation5 + $0x90] sm:$0xff]
    %v126 = vld [vmem:[#allocation5 + $0x98] sm:$0xff]
    %v127 = vld [vmem:[#allocation5 + $0xa0] sm:$0xff]
    %v128 = vld [vmem:[#allocation5 + $0xa8] sm:$0xff]
    %v129 = vld [vmem:[#allocation5 + $0xb0] sm:$0xff]
    %v130 = vld [vmem:[#allocation5 + $0xb8] sm:$0xff]
    %v131 = vld [vmem:[#allocation5 + $0xc0] sm:$0xff]
    %v132 = vld [vmem:[#allocation5 + $0xc8] sm:$0xff]
    %v133 = vld [vmem:[#allocation5 + $0xd0] sm:$0xff]
    %v134 = vld [vmem:[#allocation5 + $0xd8] sm:$0xff]
    %v135 = vld [vmem:[#allocation5 + $0xe0] sm:$0xff]
    %v136 = vld [vmem:[#allocation5 + $0xe8] sm:$0xff]
    %v137 = vld [vmem:[#allocation5 + $0xf0] sm:$0xff]
    %v138 = vld [vmem:[#allocation5 + $0xf8] sm:$0xff]
    %v139 = vld [vmem:[%s2] sm:$0x1]
    %v141 = vlaneseq
    %v142 = vshrl.u32 %v141, 7
    %v143 = vsub.s32 0, %v142
    %v144 = vrot.slane %v139, %v143
    %vm150 = vcmask 1041409
    %v151 = vsel %vm150, %v105, %v103
    %v152 = vsel %vm150, %v106, %v104
    %155 = vmatprep.subr.mxu0 0.0
    %156 = vmatpush1.msra.mxu0 %v122
    %157 = vmatprep.subr.mxu0 0.0
    %158 = vmatpush1.msra.mxu0 %v121
    %159 = vmatprep.subr.mxu0 0.0
    %160 = vmatpush1.msra.mxu0 %v120
    %161 = vmatprep.subr.mxu0 0.0
    %162 = vmatpush1.msra.mxu0 %v119
    %163 = vmatprep.subr.mxu0 0.0
    %164 = vmatpush1.msra.mxu0 %v118
    %165 = vmatprep.subr.mxu0 0.0
    %166 = vmatpush1.msra.mxu0 %v117
    %167 = vmatprep.subr.mxu0 0.0
    %168 = vmatpush1.msra.mxu0 %v116
    %169 = vmatprep.subr.mxu0 0.0
    %170 = vmatpush1.msra.mxu0 %v115
    %171 = vmatprep.subr.mxu0 0.0
    %172 = vmatpush1.msra.mxu0 %v114
    %173 = vmatprep.subr.mxu0 0.0
    %174 = vmatpush1.msra.mxu0 %v113
    %175 = vmatprep.subr.mxu0 0.0
    %176 = vmatpush1.msra.mxu0 %v112
    %177 = vmatprep.subr.mxu0 0.0
    %178 = vmatpush1.msra.mxu0 %v111
    %179 = vmatprep.subr.mxu0 0.0
    %180 = vmatpush1.msra.mxu0 %v110
    %181 = vmatprep.subr.mxu0 0.0
    %182 = vmatpush1.msra.mxu0 %v109
    %183 = vmatprep.subr.mxu0 0.0
    %184 = vmatpush1.msra.mxu0 %v108
    %185 = vmatprep.subr.mxu0 0.0
    %186 = vmatpush1.msra.mxu0 %v107
    %187 = vmatprep.subr.mxu0 0.0
    %188 = vmatpush2.msra.mxu0 %v138
    %189 = vmatprep.subr.mxu0 0.0
    %190 = vmatpush2.msra.mxu0 %v137
    %191 = vmatprep.subr.mxu0 0.0
    %192 = vmatpush2.msra.mxu0 %v136
    %193 = vmatprep.subr.mxu0 0.0
    %194 = vmatpush2.msra.mxu0 %v135
    %195 = vmatprep.subr.mxu0 0.0
    %196 = vmatpush2.msra.mxu0 %v134
    %197 = vmatprep.subr.mxu0 0.0
    %198 = vmatpush2.msra.mxu0 %v133
    %199 = vmatprep.subr.mxu0 0.0
    %200 = vmatpush2.msra.mxu0 %v132
    %201 = vmatprep.subr.mxu0 0.0
    %202 = vmatpush2.msra.mxu0 %v131
    %203 = vmatprep.subr.mxu0 0.0
    %204 = vmatpush2.msra.mxu0 %v130
    %205 = vmatprep.subr.mxu0 0.0
    %206 = vmatpush2.msra.mxu0 %v129
    %207 = vmatprep.subr.mxu0 0.0
    %208 = vmatpush2.msra.mxu0 %v128
    %209 = vmatprep.subr.mxu0 0.0
    %210 = vmatpush2.msra.mxu0 %v127
    %211 = vmatprep.subr.mxu0 0.0
    %212 = vmatpush2.msra.mxu0 %v126
    %213 = vmatprep.subr.mxu0 0.0
    %214 = vmatpush2.msra.mxu0 %v125
    %215 = vmatprep.subr.mxu0 0.0
    %216 = vmatpush2.msra.mxu0 %v124
    %217 = vmatprep.subr.mxu0 0.0
    %218 = vmatpush2.msra.mxu0 %v123
    %219 = vmatprep.mubr.f32.mxu0 %v152
    %220 = vmatmul.mubr.f32.gmra.mxu0 %v151
    %v221 = vpop.f32.mrf.mxu0
    %v222 = vadd.f32 %v144, %v221
    %v223 = vpop.f32.mrf.mxu0
    %224 = vdwg.mxu0
    %v225 = vmax.f32 %v222, 0.0
    %v226 = vld [vmem:[#allocation7] sm:$0xff]
    %v227 = vld [vmem:[#allocation7 + $0x8] sm:$0xff]
    %v228 = vld [vmem:[#allocation7 + $0x10] sm:$0xff]
    %v229 = vld [vmem:[#allocation7 + $0x18] sm:$0xff]
    %v230 = vld [vmem:[#allocation7 + $0x20] sm:$0xff]
    %v231 = vld [vmem:[#allocation7 + $0x28] sm:$0xff]
    %v232 = vld [vmem:[#allocation7 + $0x30] sm:$0xff]
    %v233 = vld [vmem:[#allocation7 + $0x38] sm:$0xff]
    %v234 = vld [vmem:[#allocation7 + $0x40] sm:$0xff]
    %v235 = vld [vmem:[#allocation7 + $0x48] sm:$0xff]
    %v236 = vld [vmem:[#allocation7 + $0x50] sm:$0xff]
    %v237 = vld [vmem:[#allocation7 + $0x58] sm:$0xff]
    %v238 = vld [vmem:[#allocation7 + $0x60] sm:$0xff]
    %v239 = vld [vmem:[#allocation7 + $0x68] sm:$0xff]
    %v240 = vld [vmem:[#allocation7 + $0x70] sm:$0xff]
    %v241 = vld [vmem:[#allocation7 + $0x78] sm:$0xff]
    %v242 = vld [vmem:[#allocation7 + $0x80] sm:$0xff]
    %v243 = vld [vmem:[#allocation7 + $0x88] sm:$0xff]
    %v244 = vld [vmem:[#allocation7 + $0x90] sm:$0xff]
    %v245 = vld [vmem:[#allocation7 + $0x98] sm:$0xff]
    %v246 = vld [vmem:[#allocation7 + $0xa0] sm:$0xff]
    %v247 = vld [vmem:[#allocation7 + $0xa8] sm:$0xff]
    %v248 = vld [vmem:[#allocation7 + $0xb0] sm:$0xff]
    %v249 = vld [vmem:[#allocation7 + $0xb8] sm:$0xff]
    %v250 = vld [vmem:[#allocation7 + $0xc0] sm:$0xff]
    %v251 = vld [vmem:[#allocation7 + $0xc8] sm:$0xff]
    %v252 = vld [vmem:[#allocation7 + $0xd0] sm:$0xff]
    %v253 = vld [vmem:[#allocation7 + $0xd8] sm:$0xff]
    %v254 = vld [vmem:[#allocation7 + $0xe0] sm:$0xff]
    %v255 = vld [vmem:[#allocation7 + $0xe8] sm:$0xff]
    %v256 = vld [vmem:[#allocation7 + $0xf0] sm:$0xff]
    %v257 = vld [vmem:[#allocation7 + $0xf8] sm:$0xff]
    %v258 = vld [vmem:[%s4] sm:$0x3]
    %v260 = vlaneseq
    %v261 = vshrl.u32 %v260, 7
    %v262 = vsub.s32 0, %v261
    %v263 = vrot.slane %v258, %v262
    %v264 = vlaneseq
    %v265 = vshrl.u32 %v264, 7
    %v266 = vsub.s32 1, %v265
    %v267 = vrot.slane %v258, %v266
    %270 = vmatprep.subr.mxu0 %v257
    %271 = vmatpush1.msra.mxu0 %v256
    %272 = vmatprep.subr.mxu0 %v255
    %273 = vmatpush1.msra.mxu0 %v254
    %274 = vmatprep.subr.mxu0 %v253
    %275 = vmatpush1.msra.mxu0 %v252
    %276 = vmatprep.subr.mxu0 %v251
    %277 = vmatpush1.msra.mxu0 %v250
    %278 = vmatprep.subr.mxu0 %v249
    %279 = vmatpush1.msra.mxu0 %v248
    %280 = vmatprep.subr.mxu0 %v247
    %281 = vmatpush1.msra.mxu0 %v246
    %282 = vmatprep.subr.mxu0 %v245
    %283 = vmatpush1.msra.mxu0 %v244
    %284 = vmatprep.subr.mxu0 %v243
    %285 = vmatpush1.msra.mxu0 %v242
    %286 = vmatprep.subr.mxu0 %v241
    %287 = vmatpush1.msra.mxu0 %v240
    %288 = vmatprep.subr.mxu0 %v239
    %289 = vmatpush1.msra.mxu0 %v238
    %290 = vmatprep.subr.mxu0 %v237
    %291 = vmatpush1.msra.mxu0 %v236
    %292 = vmatprep.subr.mxu0 %v235
    %293 = vmatpush1.msra.mxu0 %v234
    %294 = vmatprep.subr.mxu0 %v233
    %295 = vmatpush1.msra.mxu0 %v232
    %296 = vmatprep.subr.mxu0 %v231
    %297 = vmatpush1.msra.mxu0 %v230
    %298 = vmatprep.subr.mxu0 %v229
    %299 = vmatpush1.msra.mxu0 %v228
    %300 = vmatprep.subr.mxu0 %v227
    %301 = vmatpush1.msra.mxu0 %v226
    %302 = vmatprep.subr.mxu0 0.0
    %303 = vmatpush2.msra.mxu0 0.0
    %304 = vmatprep.subr.mxu0 0.0
    %305 = vmatpush2.msra.mxu0 0.0
    %306 = vmatprep.subr.mxu0 0.0
    %307 = vmatpush2.msra.mxu0 0.0
    %308 = vmatprep.subr.mxu0 0.0
    %309 = vmatpush2.msra.mxu0 0.0
    %310 = vmatprep.subr.mxu0 0.0
    %311 = vmatpush2.msra.mxu0 0.0
    %312 = vmatprep.subr.mxu0 0.0
    %313 = vmatpush2.msra.mxu0 0.0
    %314 = vmatprep.subr.mxu0 0.0
    %315 = vmatpush2.msra.mxu0 0.0
    %316 = vmatprep.subr.mxu0 0.0
    %317 = vmatpush2.msra.mxu0 0.0
    %318 = vmatprep.subr.mxu0 0.0
    %319 = vmatpush2.msra.mxu0 0.0
    %320 = vmatprep.subr.mxu0 0.0
    %321 = vmatpush2.msra.mxu0 0.0
    %322 = vmatprep.subr.mxu0 0.0
    %323 = vmatpush2.msra.mxu0 0.0
    %324 = vmatprep.subr.mxu0 0.0
    %325 = vmatpush2.msra.mxu0 0.0
    %326 = vmatprep.subr.mxu0 0.0
    %327 = vmatpush2.msra.mxu0 0.0
    %328 = vmatprep.subr.mxu0 0.0
    %329 = vmatpush2.msra.mxu0 0.0
    %330 = vmatprep.subr.mxu0 0.0
    %331 = vmatpush2.msra.mxu0 0.0
    %332 = vmatprep.subr.mxu0 0.0
    %333 = vmatpush2.msra.mxu0 0.0
    %334 = vmatprep.mubr.f32.mxu0 0.0
    %335 = vmatmul.mubr.f32.gmra.mxu0 %v225
    %v336 = vpop.f32.mrf.mxu0
    %v337 = vadd.f32 %v263, %v336
    %v338 = vpop.f32.mrf.mxu0
    %v339 = vadd.f32 %v267, %v338
    %340 = vdwg.mxu0
    %v341 = vadd.f32 %v337, 3.0
    %v342 = vadd.f32 %v339, 3.0
    %v343 = vmax.f32 %v341, 0.0
    %v344 = vmax.f32 %v342, 0.0
    %v345 = vmin.f32 %v343, 6.0
    %v346 = vmin.f32 %v344, 6.0
    %v347 = vmul.f32 %v345, 0.16666667
    %v348 = vmul.f32 %v346, 0.16666667
    %v349 = vsub.f32 %v347, 0.5
    %v350 = vsub.f32 %v348, 0.5
    %v351 = vadd.f32 %v349, 1.0
    %v352 = vadd.f32 %v350, 1.0
    %v355 = vcombine.low %v351, %v352
    %v357 = vunpack.c.l.s4 1966171168
    %v358 = vunpack.c.0.s8 %v357
    %v359 = vlaneseq
    %v360 = vshrl.u32 %v359, 7
    %v361 = vsub.s32 %v358, %v360
    %v362 = vrot.slane %v355, %v361
    %v363 = vcombine.high %v362, %v362
    %v365 = vunpack.c.l.s4 1966171168
    %v366 = vunpack.c.0.s8 %v365
    %v367 = vlaneseq
    %v368 = vshrl.u32 %v367, 7
    %v369 = vsub.s32 %v366, %v368
    %v370 = vrot.slane %v362, %v369
    %v372 = vunpack.c.l.s4 1966171168
    %v373 = vunpack.c.0.s8 %v372
    %v374 = vlaneseq
    %v375 = vshrl.u32 %v374, 7
    %v376 = vsub.s32 %v373, %v375
    %v377 = vrot.slane %v363, %v376
    %v378 = vlaneseq
    %v379 = vshrl.u32 %v378, 7
    %v380 = vsub.s32 0, %v379
    %v381 = vrot.slane %v370, %v380
    %v382 = vlaneseq
    %v383 = vshrl.u32 %v382, 7
    %v384 = vsub.s32 1, %v383
    %v385 = vrot.slane %v370, %v384
    %v386 = vlaneseq
    %v387 = vshrl.u32 %v386, 7
    %v388 = vsub.s32 0, %v387
    %v389 = vrot.slane %v377, %v388
    %v390 = vlaneseq
    %v391 = vshrl.u32 %v390, 7
    %v392 = vsub.s32 1, %v391
    %v393 = vrot.slane %v377, %v392
    %v394 = vcombine.low %v381, %v385
    %v395 = vcombine.low %v389, %v393
    %v398 = vmul.f32 %v62, %v394
    %v399 = vmul.f32 %v63, %v395
    %400 = vst [vmem:[#allocation8] sm:$0xff] %v398
    %401 = vst [vmem:[#allocation8 + $0x8] sm:$0xff] %v399
    // Predicated region
    $region34: #{tpu_custom_call.1} parent=1 // pred_check
      _
    $region35: #{tpu_custom_call.1} parent=1 // pred_check_branch
      %403 = sbr.rel (0) target = $region37
    $region36: #{tpu_custom_call.1} parent=1 // pred_region
      %s405 = ssub.s32 256, 256
      %406 = vsyncadd [#allocation4], %s405
      %s407 = sshll.u32 [#allocation8], 4
      %s408 = int_to_ptr.vmem [resolvable:$true] %s407
      %413 = dma.vmem_to_hbm [thread:$0]  %s408, 256, %s5, [#allocation4], 128, 128, 8
    $region37: #{tpu_custom_call.1} parent=1 // pred_fallthru
      _
    // Predicated region
    $region38: #{tpu_custom_call.1} parent=1 // pred_check
      _
    $region39: #{tpu_custom_call.1} parent=1 // pred_check_branch
      %415 = sbr.rel (0) target = $region41
    $region40: #{tpu_custom_call.1} parent=1 // pred_region
      %416 = dma.done [#allocation4], 256
    $region41: #{tpu_custom_call.1} parent=1 // pred_fallthru
      _
    %417 = vsyncpa [#allocation3], 1
    %418 = vsyncpa [#allocation6], 1
    %419 = vsyncpa [#allocation4], 1

</llo_original>
